<compile_context>
chip_gen: v5e
topology: v5e:2x2
jax: 0.10.0
libtpu: 0.0.40
codegen_flags: <defaults>
</compile_context>

<pallas_src>
import jax
import jax.numpy as jnp
from jax.experimental import pallas as pl
from jax.experimental.pallas import tpu as pltpu


def _round_up(x, m):
    return ((x + m - 1) // m) * m


def policy_net_kernel(x_ref, w1_ref, b1_ref, w2_ref, b2_ref, out_ref):
    # Linear(in, hidden_padded) + ReLU. MXU matmul, f32 accumulation; the
    # padded hidden columns are exact zeros (zero weights/bias under ReLU).
    x = x_ref[...]
    h = jnp.dot(x, w1_ref[...], preferred_element_type=jnp.float32) + b1_ref[...]
    h = jnp.maximum(h, 0.0)

    # Linear(hidden_padded, 128-lane padded logits). Padded output lanes carry
    # a huge-negative bias so exp() underflows to exactly 0 below.
    logits = jnp.dot(h, w2_ref[...], preferred_element_type=jnp.float32) + b2_ref[...]

    # Numerically stable softmax over the full 128-lane tile. Exact divide:
    # compute slots have enormous slack under DMA time, and rows sum to 1.
    m = jnp.max(logits, axis=-1, keepdims=True)
    e = jnp.exp(logits - m)
    probs = e / jnp.sum(e, axis=-1, keepdims=True)

    # Store only the real action columns (out block is (TB, output_dim)).
    out_ref[...] = probs[:, : out_ref.shape[-1]].astype(out_ref.dtype)


def prepare_params(w1, b1, w2, b2):
    """One-time weight padding (hoisted out of the per-call forward path)."""
    input_dim, hidden = w1.shape
    output_dim = w2.shape[1]
    hp = _round_up(hidden, 128)      # hidden 64 -> 128 lanes (zeros, exact under ReLU)
    np_ = _round_up(output_dim, 128)  # lane-dense logit width inside the kernel
    neg = jnp.float32(-1e30)          # exp(neg - m) underflows to 0.0 in f32

    w1_p = jnp.zeros((input_dim, hp), jnp.float32).at[:, :hidden].set(w1)
    b1_p = jnp.zeros((1, hp), jnp.float32).at[:, :hidden].set(b1.reshape(1, hidden))
    w2_p = jnp.zeros((hp, np_), jnp.float32).at[:hidden, :output_dim].set(w2)
    b2_p = jnp.full((1, np_), neg, jnp.float32).at[:, :output_dim].set(
        b2.reshape(1, output_dim))
    return {"w1": w1_p, "b1": b1_p, "w2": w2_p, "b2": b2_p,
            "input_dim": input_dim, "output_dim": output_dim}


def policy_network_forward(x, params, *, block_batch=2048):
    """x: (B, input_dim) f32; params: output of prepare_params().

    Returns softmax probabilities of shape (B, output_dim), f32.
    """
    B, input_dim = x.shape
    assert input_dim == params["input_dim"]
    w1_p, b1_p, w2_p, b2_p = params["w1"], params["b1"], params["w2"], params["b2"]
    hp, np_ = w1_p.shape[1], w2_p.shape[1]
    output_dim = params["output_dim"]

    # Batch tile: large tiles (kernel is HBM/overhead-bound; VMEM per tile is
    # well under 1 MB even at 2048 rows), and at least 2 grid steps whenever
    # the batch allows so v7x's two TensorCores both get work. No padded copy
    # of x is made; the ragged final tile's out-of-bounds rows are masked on
    # the output store.
    if B <= 8:
        tb = B                                            # single full-batch tile
    else:
        tb = min(block_batch, _round_up(pl.cdiv(B, 2), 8))
    grid = (pl.cdiv(B, tb),)

    return pl.pallas_call(
        policy_net_kernel,
        out_shape=jax.ShapeDtypeStruct((B, output_dim), jnp.float32),
        grid=grid,
        in_specs=[
            pl.BlockSpec((tb, input_dim), lambda i: (i, 0)),   # batch-tiled input
            pl.BlockSpec((input_dim, hp), lambda i: (0, 0)),   # weights stay resident
            pl.BlockSpec((1, hp), lambda i: (0, 0)),
            pl.BlockSpec((hp, np_), lambda i: (0, 0)),
            pl.BlockSpec((1, np_), lambda i: (0, 0)),
        ],
        out_specs=pl.BlockSpec((tb, output_dim), lambda i: (i, 0)),  # narrow store
        compiler_params=pltpu.CompilerParams(
            dimension_semantics=("parallel",),   # v7x: shard batch tiles across TCs
        ),
    )(x, w1_p, b1_p, w2_p, b2_p)


def init_params(key, input_dim, hidden, output_dim):
    """Deterministic init mimicking PyTorch's default Linear init (U[-1/sqrt(fan_in), +])."""
    k1, k2, k3, k4 = jax.random.split(key, 4)
    bound1 = 1.0 / jnp.sqrt(input_dim)
    bound2 = 1.0 / jnp.sqrt(hidden)
    w1 = jax.random.uniform(k1, (input_dim, hidden), jnp.float32, -bound1, bound1)
    b1 = jax.random.uniform(k2, (1, hidden), jnp.float32, -bound1, bound1)
    w2 = jax.random.uniform(k3, (hidden, output_dim), jnp.float32, -bound2, bound2)
    b2 = jax.random.uniform(k4, (1, output_dim), jnp.float32, -bound2, bound2)
    return w1, b1, w2, b2


def _reference(x, w1, b1, w2, b2):
    h = jnp.maximum(x @ w1 + b1, 0.0)
    return jax.nn.softmax(h @ w2 + b2, axis=-1)


if __name__ == "__main__":
    key = jax.random.PRNGKey(0)
    kp, kx, kx2 = jax.random.split(key, 3)

    batch = 8
    input_dim = 16   # e.g. observation dim
    hidden = 64      # fixed by the module
    output_dim = 4   # e.g. number of actions

    w1, b1, w2, b2 = init_params(kp, input_dim, hidden, output_dim)
    params = prepare_params(w1, b1, w2, b2)   # padded once, reused every call

    # --- small "policy step" shape ---------------------------------------
    x = jax.random.normal(kx, (batch, input_dim), jnp.float32)
    probs = jax.block_until_ready(policy_network_forward(x, params))
    ref = _reference(x, w1, b1, w2, b2)
    assert probs.shape == (batch, output_dim)
    assert jnp.allclose(probs, ref, atol=1e-5, rtol=1e-5)
    assert jnp.allclose(jnp.sum(probs, axis=-1), 1.0, atol=1e-5)

    # --- larger, non-divisible batch: 2 parallel grid steps + ragged tile --
    big_batch = 300
    x_big = jax.random.normal(kx2, (big_batch, input_dim), jnp.float32)
    probs_big = jax.block_until_ready(policy_network_forward(x_big, params))
    ref_big = _reference(x_big, w1, b1, w2, b2)
    assert probs_big.shape == (big_batch, output_dim)
    assert jnp.allclose(probs_big, ref_big, atol=1e-5, rtol=1e-5)
    assert jnp.allclose(jnp.sum(probs_big, axis=-1), 1.0, atol=1e-5)

    print("KERNEL_OK")
</pallas_src>

<mosaic_0001>
module attributes {stable_mosaic.version = 11 : i64} {
  func.func @policy_net_kernel(%arg0: i32, %arg1: memref<8x16xf32, #tpu.memory_space<vmem>>, %arg2: memref<16x128xf32, #tpu.memory_space<vmem>>, %arg3: memref<1x128xf32, #tpu.memory_space<vmem>>, %arg4: memref<128x128xf32, #tpu.memory_space<vmem>>, %arg5: memref<1x128xf32, #tpu.memory_space<vmem>>, %arg6: memref<8x4xf32, #tpu.memory_space<vmem>>) attributes {dimension_semantics = [#tpu.dimension_semantics<parallel>], iteration_bounds = array<i64: 1>, scalar_prefetch = 0 : i64, scratch_operands = 0 : i64, tpu.core_type = #tpu.core_type<tc>, window_params = [{transform_indices = @transform_0, window_bounds = array<i64: 8, 16>}, {pipeline_mode = #tpu.pipeline_mode<synchronous>, transform_indices = @transform_1, window_bounds = array<i64: 16, 128>}, {pipeline_mode = #tpu.pipeline_mode<synchronous>, transform_indices = @transform_2, window_bounds = array<i64: 1, 128>}, {pipeline_mode = #tpu.pipeline_mode<synchronous>, transform_indices = @transform_3, window_bounds = array<i64: 128, 128>}, {pipeline_mode = #tpu.pipeline_mode<synchronous>, transform_indices = @transform_4, window_bounds = array<i64: 1, 128>}, {transform_indices = @transform_5, window_bounds = array<i64: 8, 4>}]} {
    %c0 = arith.constant 0 : index
    %c0_0 = arith.constant 0 : index
    %0 = vector.load %arg1[%c0, %c0_0] : memref<8x16xf32, #tpu.memory_space<vmem>>, vector<8x16xf32>
    %c0_1 = arith.constant 0 : index
    %c0_2 = arith.constant 0 : index
    %1 = vector.load %arg2[%c0_1, %c0_2] : memref<16x128xf32, #tpu.memory_space<vmem>>, vector<16x128xf32>
    %cst = arith.constant dense<0.000000e+00> : vector<8x128xf32>
    %2 = tpu.matmul %0, %1, %cst {dimension_numbers = #tpu.dot_dimension_numbers<[1], [0], [0], [1], [0, 0, 1, 1], [], []>} : vector<8x16xf32>, vector<16x128xf32>, vector<8x128xf32> -> vector<8x128xf32>
    %c0_3 = arith.constant 0 : index
    %c0_4 = arith.constant 0 : index
    %3 = vector.load %arg3[%c0_3, %c0_4] : memref<1x128xf32, #tpu.memory_space<vmem>>, vector<1x128xf32>
    %4 = vector.broadcast %3 : vector<1x128xf32> to vector<8x128xf32>
    %5 = arith.addf %2, %4 : vector<8x128xf32>
    %cst_5 = arith.constant 0.000000e+00 : f32
    %6 = vector.broadcast %cst_5 : f32 to vector<8x128xf32>
    %7 = arith.maximumf %5, %6 : vector<8x128xf32>
    %c0_6 = arith.constant 0 : index
    %c0_7 = arith.constant 0 : index
    %8 = vector.load %arg4[%c0_6, %c0_7] : memref<128x128xf32, #tpu.memory_space<vmem>>, vector<128x128xf32>
    %cst_8 = arith.constant dense<0.000000e+00> : vector<8x128xf32>
    %9 = tpu.matmul %7, %8, %cst_8 {dimension_numbers = #tpu.dot_dimension_numbers<[1], [0], [0], [1], [0, 0, 1, 1], [], []>} : vector<8x128xf32>, vector<128x128xf32>, vector<8x128xf32> -> vector<8x128xf32>
    %c0_9 = arith.constant 0 : index
    %c0_10 = arith.constant 0 : index
    %10 = vector.load %arg5[%c0_9, %c0_10] : memref<1x128xf32, #tpu.memory_space<vmem>>, vector<1x128xf32>
    %11 = vector.broadcast %10 : vector<1x128xf32> to vector<8x128xf32>
    %12 = arith.addf %9, %11 : vector<8x128xf32>
    %cst_11 = arith.constant dense<0xFF800000> : vector<8xf32>
    %13 = vector.multi_reduction <maximumf>, %12, %cst_11 [1] : vector<8x128xf32> to vector<8xf32>
    %14 = vector.shape_cast %13 : vector<8xf32> to vector<8x1xf32>
    %15 = vector.broadcast %14 : vector<8x1xf32> to vector<8x128xf32>
    %16 = arith.subf %12, %15 : vector<8x128xf32>
    %17 = math.exp %16 : vector<8x128xf32>
    %cst_12 = arith.constant dense<0.000000e+00> : vector<8xf32>
    %18 = vector.multi_reduction <add>, %17, %cst_12 [1] : vector<8x128xf32> to vector<8xf32>
    %19 = vector.shape_cast %18 : vector<8xf32> to vector<8x1xf32>
    %20 = vector.broadcast %19 : vector<8x1xf32> to vector<8x128xf32>
    %21 = arith.divf %17, %20 : vector<8x128xf32>
    %22 = vector.extract_strided_slice %21 {offsets = [0, 0], sizes = [8, 4], strides = [1, 1]} : vector<8x128xf32> to vector<8x4xf32>
    %c0_13 = arith.constant 0 : index
    %c0_14 = arith.constant 0 : index
    %23 = vector.load %arg6[%c0_13, %c0_14] : memref<8x4xf32, #tpu.memory_space<vmem>>, vector<8x4xf32>
    tpu.vector_store %arg6[%c0_13, %c0_14], %22 {strides = array<i32>} : memref<8x4xf32, #tpu.memory_space<vmem>>, vector<8x4xf32>,
    return
  }
  func.func @transform_0(%arg0: i32) -> (i32, i32) {
    %c0_i32 = arith.constant 0 : i32
    %c0_i32_0 = arith.constant 0 : i32
    return %arg0, %c0_i32 : i32, i32
  }
  func.func @transform_1(%arg0: i32) -> (i32, i32) {
    %c0_i32 = arith.constant 0 : i32
    %c0_i32_0 = arith.constant 0 : i32
    %c0_i32_1 = arith.constant 0 : i32
    return %c0_i32, %c0_i32_0 : i32, i32
  }
  func.func @transform_2(%arg0: i32) -> (i32, i32) {
    %c0_i32 = arith.constant 0 : i32
    %c0_i32_0 = arith.constant 0 : i32
    %c0_i32_1 = arith.constant 0 : i32
    return %c0_i32, %c0_i32_0 : i32, i32
  }
  func.func @transform_3(%arg0: i32) -> (i32, i32) {
    %c0_i32 = arith.constant 0 : i32
    %c0_i32_0 = arith.constant 0 : i32
    %c0_i32_1 = arith.constant 0 : i32
    return %c0_i32, %c0_i32_0 : i32, i32
  }
  func.func @transform_4(%arg0: i32) -> (i32, i32) {
    %c0_i32 = arith.constant 0 : i32
    %c0_i32_0 = arith.constant 0 : i32
    %c0_i32_1 = arith.constant 0 : i32
    return %c0_i32, %c0_i32_0 : i32, i32
  }
  func.func @transform_5(%arg0: i32) -> (i32, i32) {
    %c0_i32 = arith.constant 0 : i32
    %c0_i32_0 = arith.constant 0 : i32
    return %arg0, %c0_i32 : i32, i32
  }
}

</mosaic_0001>

<llo_original>
// kernel: tpu_custom_call.1
$region0: #{tpu_custom_call.1}
  #allocation0 [shape = 'u32[]', space=smem, size = 0x4, offset = 0x4, fixed_abs, tag = 'smem constant byte address 0x4 - core index']
  #allocation1 [shape = 'u32[72,128]{1,0:T(1,128)}', space=vmem, size = 0x9000, scoped, tag = 'internal scratch']
  %s0 = inlined_call_operand.hbm [shape: f32[8,16], index: 0, kind: input, shape index: {}]
  %s1 = inlined_call_operand.hbm [shape: f32[16,128], index: 1, kind: input, shape index: {}]
  %s2 = inlined_call_operand.vmem [shape: f32[1,128], index: 2, kind: input, shape index: {}]
  %s3 = inlined_call_operand.hbm [shape: f32[128,128], index: 3, kind: input, shape index: {}]
  %s4 = inlined_call_operand.vmem [shape: f32[1,128], index: 4, kind: input, shape index: {}]
  %s5 = inlined_call_operand.vmem [shape: f32[8,4], index: 5, kind: output, shape index: {}]
  %s6 = sld [smem:[#allocation0]]
  $region42: #{tpu_custom_call.1} parent=0
    _
  %s8 = ssub.s32 1, %s6
  %s9 = scalar_select 0, %s8, %s6
  $region1: #{tpu_custom_call.1} parent=0
    #allocation2 [shape = 'u8[4096]{0}', space=vmem, size = 0x1000, scoped, tag = 'input window, operand 0, single buffered']
    #allocation3 [shape = 's32[1]{0}', space=sflag, size = 0x4, scoped, tag = 'scoped memory for tpu_custom_call.1']
    #allocation4 [shape = 'u8[8192]{0}', space=vmem, size = 0x2000, scoped, tag = 'input window, operand 1, single buffered']
    #allocation5 [shape = 's32[1]{0}', space=sflag, size = 0x4, scoped, tag = 'scoped memory for tpu_custom_call.1']
    #allocation6 [shape = 'u8[65536]{0}', space=vmem, size = 0x10000, scoped, tag = 'input window, operand 3, single buffered']
    %10 = vsyncpa [#allocation3], 0
    %11 = vsyncpa [#allocation5], 0
    // Predicated region
    $region2: #{tpu_custom_call.1} parent=1 // pred_check
      _
    $region3: #{tpu_custom_call.1} parent=1 // pred_check_branch
      %13 = sbr.rel (0) target = $region5
    $region4: #{tpu_custom_call.1} parent=1 // pred_region
      %15 = vsyncadd [#allocation3], 0
      %s17 = sshll.u32 %s0, 4
      %s18 = int_to_ptr.hbm [resolvable:$true] %s17
      %s19 = sshll.u32 [#allocation2], 4
      %s20 = int_to_ptr.vmem [resolvable:$true] %s19
      %22 = dma.hbm_to_vmem [thread:$0]  %s18, 128, %s20, [#allocation3]
    $region5: #{tpu_custom_call.1} parent=1 // pred_fallthru
      _
    // Predicated region
    $region6: #{tpu_custom_call.1} parent=1 // pred_check
      _
    $region7: #{tpu_custom_call.1} parent=1 // pred_check_branch
      %24 = sbr.rel (0) target = $region9
    $region8: #{tpu_custom_call.1} parent=1 // pred_region
      %26 = vsyncadd [#allocation5], 0
      %s27 = sshll.u32 %s1, 4
      %s28 = int_to_ptr.hbm [resolvable:$true] %s27
      %s29 = sshll.u32 [#allocation4], 4
      %s30 = int_to_ptr.vmem [resolvable:$true] %s29
      %35 = dma.hbm_to_vmem [thread:$0]  %s28, 256, %s30, [#allocation5], 128, 128, 8
    $region9: #{tpu_custom_call.1} parent=1 // pred_fallthru
      _
    // Predicated region
    $region10: #{tpu_custom_call.1} parent=1 // pred_check
      _
    $region11: #{tpu_custom_call.1} parent=1 // pred_check_branch
      %37 = sbr.rel (0) target = $region13
    $region12: #{tpu_custom_call.1} parent=1 // pred_region
      _
    $region13: #{tpu_custom_call.1} parent=1 // pred_fallthru
      _
    // Predicated region
    $region14: #{tpu_custom_call.1} parent=1 // pred_check
      _
    $region15: #{tpu_custom_call.1} parent=1 // pred_check_branch
      %39 = sbr.rel (0) target = $region17
    $region16: #{tpu_custom_call.1} parent=1 // pred_region
      %41 = vsyncadd [#allocation5], 0
      %s42 = sshll.u32 %s3, 4
      %s43 = int_to_ptr.hbm [resolvable:$true] %s42
      %s44 = sshll.u32 [#allocation6], 4
      %s45 = int_to_ptr.vmem [resolvable:$true] %s44
      %50 = dma.hbm_to_vmem [thread:$0]  %s43, 2048, %s45, [#allocation5], 128, 128, 8
    $region17: #{tpu_custom_call.1} parent=1 // pred_fallthru
      _
    // Predicated region
    $region18: #{tpu_custom_call.1} parent=1 // pred_check
      _
    $region19: #{tpu_custom_call.1} parent=1 // pred_check_branch
      %52 = sbr.rel (0) target = $region21
    $region20: #{tpu_custom_call.1} parent=1 // pred_region
      _
    $region21: #{tpu_custom_call.1} parent=1 // pred_fallthru
      _
    // Predicated region
    $region22: #{tpu_custom_call.1} parent=1 // pred_check
      _
    $region23: #{tpu_custom_call.1} parent=1 // pred_check_branch
      %54 = sbr.rel (0) target = $region25
    $region24: #{tpu_custom_call.1} parent=1 // pred_region
      %56 = dma.done [#allocation3], 128
    $region25: #{tpu_custom_call.1} parent=1 // pred_fallthru
      _
    // Predicated region
    $region26: #{tpu_custom_call.1} parent=1 // pred_check
      _
    $region27: #{tpu_custom_call.1} parent=1 // pred_check_branch
      %58 = sbr.rel (0) target = $region29
    $region28: #{tpu_custom_call.1} parent=1 // pred_region
      %60 = dma.done [#allocation5], 256
    $region29: #{tpu_custom_call.1} parent=1 // pred_fallthru
      _
    // Predicated region
    $region30: #{tpu_custom_call.1} parent=1 // pred_check
      _
    $region31: #{tpu_custom_call.1} parent=1 // pred_check_branch
      %62 = sbr.rel (0) target = $region33
    $region32: #{tpu_custom_call.1} parent=1 // pred_region
      %64 = dma.done [#allocation5], 2048
    $region33: #{tpu_custom_call.1} parent=1 // pred_fallthru
      _
    %v65 = vld [vmem:[#allocation2] sm:$0xff]
    %v66 = vld [vmem:[#allocation4] sm:$0xff]
    %v67 = vld [vmem:[#allocation4 + $0x8] sm:$0xff]
    %v68 = vld [vmem:[%s2] sm:$0x1]
    %v70 = vperm.slane %v68, 0
    %vm72 = vcmask 130048
    %v74 = vsel %vm72, %v65, 0
    %76 = vmatpush.msra.mxu0 0.0
    %77 = vmatpush.msra.mxu0 0.0
    %78 = vmatpush.msra.mxu0 0.0
    %79 = vmatpush.msra.mxu0 0.0
    %80 = vmatpush.msra.mxu0 0.0
    %81 = vmatpush.msra.mxu0 0.0
    %82 = vmatpush.msra.mxu0 0.0
    %83 = vmatpush.msra.mxu0 0.0
    %84 = vmatpush.msra.mxu0 0.0
    %85 = vmatpush.msra.mxu0 0.0
    %86 = vmatpush.msra.mxu0 0.0
    %87 = vmatpush.msra.mxu0 0.0
    %88 = vmatpush.msra.mxu0 0.0
    %89 = vmatpush.msra.mxu0 0.0
    %90 = vmatpush.msra.mxu0 %v67
    %91 = vmatpush.msra.mxu0 %v66
    %92 = vmatmul.f32.gmra.mxu0 %v74
    %v93 = vpop.f32.mrf.mxu0
    %v94 = vadd.f32 %v70, %v93
    %95 = vdwg.mxu0
    %v96 = vmax.f32 %v94, 0.0
    %v97 = vld [vmem:[#allocation6] sm:$0xff]
    %v98 = vld [vmem:[#allocation6 + $0x8] sm:$0xff]
    %v99 = vld [vmem:[#allocation6 + $0x10] sm:$0xff]
    %v100 = vld [vmem:[#allocation6 + $0x18] sm:$0xff]
    %v101 = vld [vmem:[#allocation6 + $0x20] sm:$0xff]
    %v102 = vld [vmem:[#allocation6 + $0x28] sm:$0xff]
    %v103 = vld [vmem:[#allocation6 + $0x30] sm:$0xff]
    %v104 = vld [vmem:[#allocation6 + $0x38] sm:$0xff]
    %v105 = vld [vmem:[#allocation6 + $0x40] sm:$0xff]
    %v106 = vld [vmem:[#allocation6 + $0x48] sm:$0xff]
    %v107 = vld [vmem:[#allocation6 + $0x50] sm:$0xff]
    %v108 = vld [vmem:[#allocation6 + $0x58] sm:$0xff]
    %v109 = vld [vmem:[#allocation6 + $0x60] sm:$0xff]
    %v110 = vld [vmem:[#allocation6 + $0x68] sm:$0xff]
    %v111 = vld [vmem:[#allocation6 + $0x70] sm:$0xff]
    %v112 = vld [vmem:[#allocation6 + $0x78] sm:$0xff]
    %v113 = vld [vmem:[%s4] sm:$0x1]
    %v115 = vperm.slane %v113, 0
    %117 = vmatpush.msra.mxu0 %v112
    %118 = vmatpush.msra.mxu0 %v111
    %119 = vmatpush.msra.mxu0 %v110
    %120 = vmatpush.msra.mxu0 %v109
    %121 = vmatpush.msra.mxu0 %v108
    %122 = vmatpush.msra.mxu0 %v107
    %123 = vmatpush.msra.mxu0 %v106
    %124 = vmatpush.msra.mxu0 %v105
    %125 = vmatpush.msra.mxu0 %v104
    %126 = vmatpush.msra.mxu0 %v103
    %127 = vmatpush.msra.mxu0 %v102
    %128 = vmatpush.msra.mxu0 %v101
    %129 = vmatpush.msra.mxu0 %v100
    %130 = vmatpush.msra.mxu0 %v99
    %131 = vmatpush.msra.mxu0 %v98
    %132 = vmatpush.msra.mxu0 %v97
    %133 = vmatmul.f32.gmra.mxu0 %v96
    %v134 = vpop.f32.mrf.mxu0
    %v135 = vadd.f32 %v115, %v134
    %136 = vdwg.mxu0
    %137 = vmax.xlane.f32.xlu0 %v135
    %v138 = vpop.xlane.xlu0 %137
    %v139 = vsub.f32 %v135, %v138
    %v140 = vmul.f32 %v139, 1.442695
    %v141 = vpow.pop %v140
    %142 = vadd.xlane.f32.xlu0 %v141
    %v143 = vpop.xlane.xlu0 %142
    %v144 = vrcp.pop %v143
    %v145 = vmul.f32 %v143, %v144
    %v146 = vsub.f32 1.0, %v145
    %v147 = vmul.f32 %v144, %v146
    %v148 = vadd.f32 %v144, %v147
    %vm149 = vweird.f32 %v143
    %vm150 = vweird.f32 %v144
    %vm151 = vmor %vm149, %vm150
    %v152 = vsel %vm151, %v144, %v148
    %v153 = vand.u32 2147483647, %v143
    %vm154 = vcmp.eq.f32.partialorder %v153, 8.507059e+37
    %v155 = vand.u32 %v143, 2147483648
    %v156 = vor.u32 1.1754944e-38, %v155
    %v157 = vsel %vm154, %v156, %v152
    %v158 = vmul.f32 %v141, %v157
    %vm159 = vcmask 31744
    %160 = vst.msk [vmem:[%s5] sm:$0xff] %vm159, %v158
    // Predicated region
    $region34: #{tpu_custom_call.1} parent=1 // pred_check
      _
    $region35: #{tpu_custom_call.1} parent=1 // pred_check_branch
      %162 = sbr.rel (0) target = $region37
    $region36: #{tpu_custom_call.1} parent=1 // pred_region
      _
    $region37: #{tpu_custom_call.1} parent=1 // pred_fallthru
      _
    // Predicated region
    $region38: #{tpu_custom_call.1} parent=1 // pred_check
      _
    $region39: #{tpu_custom_call.1} parent=1 // pred_check_branch
      %164 = sbr.rel (0) target = $region41
    $region40: #{tpu_custom_call.1} parent=1 // pred_region
      _
    $region41: #{tpu_custom_call.1} parent=1 // pred_fallthru
      _
    %165 = vsyncpa [#allocation3], 1
    %166 = vsyncpa [#allocation5], 1

</llo_original>
